<compile_context>
chip_gen: v7x
topology: tpu7x:2x2x1
jax: 0.10.0
libtpu: 0.0.40
codegen_flags: <defaults>
</compile_context>

<pallas_src>
import jax
import jax.numpy as jnp
from jax.experimental import pallas as pl
from jax.experimental.pallas import tpu as pltpu


def _round_up(n, m):
    return ((n + m - 1) // m) * m


# ---------------------------------------------------------------------------
# Kernel body: K-tiled matmul with f32 accumulator, fused bias + sigmoid +
# soft-vote selection matmul on the last K step.
# ---------------------------------------------------------------------------
def _ensemble_kernel(x_ref, w_ref, b_ref, s_ref, t_ref, acc_ref):
    k = pl.program_id(1)

    @pl.when(k == 0)
    def _():
        acc_ref[...] = jnp.zeros_like(acc_ref)

    # [tm, tk] (bf16) @ [tk, MN_pad] (bf16) -> f32 accumulate.
    acc_ref[...] += jnp.dot(x_ref[...], w_ref[...],
                            preferred_element_type=jnp.float32)

    @pl.when(k == pl.num_programs(1) - 1)
    def _():
        logits = acc_ref[...] + b_ref[...]          # (1, MN_pad) broadcast
        probs = jax.nn.sigmoid(logits)              # f32, EUP exp path
        # Soft-voting sum over models via a 0/1 selection matmul (MXU,
        # lane-dense [tm, NC_pad] output). K = MN_pad is tiny, so f32 is fine;
        # cast to bf16 here if M*NC ever grows large.
        t_ref[...] = jnp.dot(probs, s_ref[...],
                             preferred_element_type=jnp.float32)


# ---------------------------------------------------------------------------
# One-time weight preparation (hoisted out of the per-batch forward).
# ---------------------------------------------------------------------------
def prepare_ensemble(weights, biases, *, tm_max=256, vmem_budget=12 << 20):
    """weights: [M, D, NC] f32, biases: [M, NC] f32 -> prepadded kernel params."""
    M, D, NC = weights.shape
    MN = M * NC

    # Class / model axes padded to hardware tiles. When MN exceeds 128, pad to
    # multiples of 256 so the v6e/v7x 256-wide MXU fills per pass.
    MN_pad = _round_up(MN, 128)
    if MN_pad > 128:
        MN_pad = _round_up(MN_pad, 256)
    NC_pad = _round_up(NC, 128)

    # Pick the contraction tile: largest tk whose double-buffered working set
    # (conservatively sized with tm_max rows) fits the VMEM budget.
    D_pad_min = _round_up(D, 128)
    tk = 128
    for cand in (4096, 2048, 1024, 512, 256, 128):
        if cand > D_pad_min:
            continue
        fp = (2 * (tm_max * cand + cand * MN_pad) * 2        # bf16 x, W tiles x2
              + tm_max * MN_pad * 4                           # f32 accumulator
              + 2 * MN_pad * NC_pad * 4 + 2 * MN_pad * 4      # sel + bias
              + 2 * tm_max * NC_pad * 4)                      # output tile x2
        if fp <= vmem_budget:
            tk = cand
            break
    D_pad = _round_up(D, tk)

    # Concatenate all heads: column (m*NC + c) holds model m / class c.
    w_cat = jnp.transpose(weights, (1, 0, 2)).reshape(D, MN)
    w_p = jnp.pad(w_cat.astype(jnp.bfloat16),
                  ((0, D_pad - D), (0, MN_pad - MN)))
    b_p = jnp.pad(biases.reshape(1, MN).astype(jnp.float32),
                  ((0, 0), (0, MN_pad - MN)))

    # 0/1 selection matrix summing per-model probabilities into classes.
    # Padded MN rows map to padded NC columns -> never selected.
    rows = jnp.arange(MN_pad)
    cls = jnp.where(rows < MN, rows % NC, NC_pad - 1)
    valid = (rows < MN).astype(jnp.float32)
    sel = (jax.nn.one_hot(cls, NC_pad, dtype=jnp.float32)
           * valid[:, None])

    return dict(w_p=w_p, b_p=b_p, sel=sel,
                D=D, NC=NC, MN=MN,
                D_pad=D_pad, MN_pad=MN_pad, NC_pad=NC_pad, tk=tk)


# ---------------------------------------------------------------------------
# Per-batch forward.
# ---------------------------------------------------------------------------
def ensemble_forward(x_nchw, y, params):
    """Pallas implementation of Ensemble.forward(x, y) -> [B] int32 preds."""
    del y  # unused by the reference forward pass
    B = x_nchw.shape[0]
    D, NC = params["D"], params["NC"]
    D_pad, MN_pad, NC_pad, tk = (params["D_pad"], params["MN_pad"],
                                 params["NC_pad"], params["tk"])

    # Batch tiling: single tile for small B, 128/256-row tiles (parallel
    # grid axis -> both v7x TensorCores) for large B.
    if B <= 256:
        tm = _round_up(max(B, 16), 16)
    else:
        tm = 256 if B % 256 == 0 else 128
    B_pad = _round_up(B, tm)

    # Single fused pad + bf16 cast of x (one HBM pass, half the DMA bytes).
    x_flat = x_nchw.reshape(B, D)
    x_p = jnp.pad(x_flat.astype(jnp.bfloat16),
                  ((0, B_pad - B), (0, D_pad - D)))

    grid = (B_pad // tm, D_pad // tk)

    # Explicit VMEM limit derived from the actual block footprint (+headroom),
    # capped to stay v7x-safe (64 MiB physical).
    footprint = (2 * (tm * tk + tk * MN_pad) * 2
                 + tm * MN_pad * 4
                 + 2 * MN_pad * NC_pad * 4 + 2 * MN_pad * 4
                 + 2 * tm * NC_pad * 4)
    vmem_limit = int(min(max(2 * footprint, 16 << 20), 48 << 20))

    flops = 2 * B_pad * D_pad * MN_pad + 2 * B_pad * MN_pad * NC_pad
    bytes_accessed = (x_p.size * 2 + params["w_p"].size * 2
                      + params["b_p"].size * 4 + params["sel"].size * 4
                      + B_pad * NC_pad * 4)
    cost = pl.CostEstimate(flops=flops,
                           transcendentals=B_pad * MN_pad,
                           bytes_accessed=bytes_accessed)

    t_prob = pl.pallas_call(
        _ensemble_kernel,
        out_shape=jax.ShapeDtypeStruct((B_pad, NC_pad), jnp.float32),
        grid_spec=pltpu.PrefetchScalarGridSpec(
            num_scalar_prefetch=0,
            grid=grid,
            in_specs=[
                pl.BlockSpec((tm, tk), lambda i, k: (i, k)),        # x  (bf16)
                pl.BlockSpec((tk, MN_pad), lambda i, k: (k, 0)),    # W_cat (bf16)
                pl.BlockSpec((1, MN_pad), lambda i, k: (0, 0)),     # bias (f32)
                pl.BlockSpec((MN_pad, NC_pad), lambda i, k: (0, 0)),  # selection
            ],
            out_specs=pl.BlockSpec((tm, NC_pad), lambda i, k: (i, 0)),
            scratch_shapes=[pltpu.VMEM((tm, MN_pad), jnp.float32)],
        ),
        compiler_params=pltpu.CompilerParams(
            dimension_semantics=("parallel", "arbitrary"),
            vmem_limit_bytes=vmem_limit,
        ),
        cost_estimate=cost,
    )(x_p, params["w_p"], params["b_p"], params["sel"])

    # Trivial argmax over NC classes on the unpadded slice (first-occurrence
    # tie-break, matching torch.argmax).
    preds = jnp.argmax(t_prob[:B, :NC], axis=1).astype(jnp.int32)
    return preds


# ---------------------------------------------------------------------------
# Pure-JAX reference (numerics-matched: bf16 MXU inputs, f32 accumulate).
# ---------------------------------------------------------------------------
def _reference(x_nchw, weights, biases):
    B = x_nchw.shape[0]
    M, D, NC = weights.shape
    x_flat = x_nchw.reshape(B, D)
    logits = jnp.einsum(
        "bd,mdc->bcm",
        x_flat.astype(jnp.bfloat16),
        weights.astype(jnp.bfloat16),
        preferred_element_type=jnp.float32,
    ) + biases.T[None]
    probs = jax.nn.sigmoid(logits)          # [B, NC, M]
    t_prob = jnp.sum(probs, axis=2)         # soft voting
    return jnp.argmax(t_prob, axis=1).astype(jnp.int32)


if __name__ == "__main__":
    key = jax.random.PRNGKey(0)
    B, C, H, W = 2, 4, 16, 16
    NUM_CLASSES = 10
    NUM_MODELS = 3
    D = C * H * W

    k1, k2, k3, k4 = jax.random.split(key, 4)
    x = jax.random.normal(k1, (B, C, H, W), dtype=jnp.float32)
    y = jax.random.randint(k2, (B,), 0, NUM_CLASSES, dtype=jnp.int32)
    weights = 0.05 * jax.random.normal(
        k3, (NUM_MODELS, D, NUM_CLASSES), dtype=jnp.float32)
    biases = 0.1 * jax.random.normal(
        k4, (NUM_MODELS, NUM_CLASSES), dtype=jnp.float32)

    # One-time weight preparation (model-build time), reused across batches.
    params = prepare_ensemble(weights, biases)
    params = jax.tree_util.tree_map(
        lambda a: jax.block_until_ready(a) if isinstance(a, jax.Array) else a,
        params)

    preds = ensemble_forward(x, y, params)
    preds = jax.block_until_ready(preds)

    ref = _reference(x, weights, biases)
    assert preds.shape == (B,)
    assert jnp.array_equal(preds, ref), (preds, ref)

    print("KERNEL_OK")
</pallas_src>

<mosaic_0001>
module attributes {stable_mosaic.version = 11 : i64} {
  func.func @_ensemble_kernel(%arg0: i32, %arg1: i32, %arg2: memref<16x1024xbf16, #tpu.memory_space<vmem>>, %arg3: memref<1024x128xbf16, #tpu.memory_space<vmem>>, %arg4: memref<1x128xf32, #tpu.memory_space<vmem>>, %arg5: memref<128x128xf32, #tpu.memory_space<vmem>>, %arg6: memref<16x128xf32, #tpu.memory_space<vmem>>, %arg7: memref<16x128xf32, #tpu.memory_space<vmem>>) attributes {dimension_semantics = [#tpu.dimension_semantics<parallel>, #tpu.dimension_semantics<arbitrary>], iteration_bounds = array<i64: 1, 1>, scalar_prefetch = 0 : i64, scratch_operands = 1 : i64, tpu.core_type = #tpu.core_type<tc>, window_params = [{transform_indices = @transform_0, window_bounds = array<i64: 16, 1024>}, {transform_indices = @transform_1, window_bounds = array<i64: 1024, 128>}, {pipeline_mode = #tpu.pipeline_mode<synchronous>, transform_indices = @transform_2, window_bounds = array<i64: 1, 128>}, {pipeline_mode = #tpu.pipeline_mode<synchronous>, transform_indices = @transform_3, window_bounds = array<i64: 128, 128>}, {transform_indices = @transform_4, window_bounds = array<i64: 16, 128>}]} {
    %c0_i32 = arith.constant 0 : i32
    %0 = arith.cmpi eq, %arg1, %c0_i32 : i32
    %1 = arith.extui %0 : i1 to i32
    %c0_i32_0 = arith.constant 0 : i32
    %2 = arith.cmpi ne, %1, %c0_i32_0 : i32
    scf.if %2 {
      %cst_10 = arith.constant 0.000000e+00 : f32
      %12 = vector.broadcast %cst_10 : f32 to vector<16x128xf32>
      %c0_11 = arith.constant 0 : index
      %c0_12 = arith.constant 0 : index
      %13 = vector.load %arg7[%c0_11, %c0_12] : memref<16x128xf32, #tpu.memory_space<vmem>>, vector<16x128xf32>
      tpu.vector_store %arg7[%c0_11, %c0_12], %12 {strides = array<i32>} : memref<16x128xf32, #tpu.memory_space<vmem>>, vector<16x128xf32>,
    } else {
    }
    %c0 = arith.constant 0 : index
    %c0_1 = arith.constant 0 : index
    %3 = vector.load %arg7[%c0, %c0_1] : memref<16x128xf32, #tpu.memory_space<vmem>>, vector<16x128xf32>
    %c0_2 = arith.constant 0 : index
    %c0_3 = arith.constant 0 : index
    %4 = vector.load %arg2[%c0_2, %c0_3] : memref<16x1024xbf16, #tpu.memory_space<vmem>>, vector<16x1024xbf16>
    %c0_4 = arith.constant 0 : index
    %c0_5 = arith.constant 0 : index
    %5 = vector.load %arg3[%c0_4, %c0_5] : memref<1024x128xbf16, #tpu.memory_space<vmem>>, vector<1024x128xbf16>
    %cst = arith.constant dense<0.000000e+00> : vector<16x128xf32>
    %6 = tpu.matmul %4, %5, %cst {dimension_numbers = #tpu.dot_dimension_numbers<[1], [0], [0], [1], [0, 0, 1, 1], [], []>} : vector<16x1024xbf16>, vector<1024x128xbf16>, vector<16x128xf32> -> vector<16x128xf32>
    %7 = arith.addf %3, %6 : vector<16x128xf32>
    %c0_6 = arith.constant 0 : index
    %c0_7 = arith.constant 0 : index
    %8 = vector.load %arg7[%c0_6, %c0_7] : memref<16x128xf32, #tpu.memory_space<vmem>>, vector<16x128xf32>
    tpu.vector_store %arg7[%c0_6, %c0_7], %7 {strides = array<i32>} : memref<16x128xf32, #tpu.memory_space<vmem>>, vector<16x128xf32>,
    %c0_i32_8 = arith.constant 0 : i32
    %9 = arith.cmpi eq, %arg1, %c0_i32_8 : i32
    %10 = arith.extui %9 : i1 to i32
    %c0_i32_9 = arith.constant 0 : i32
    %11 = arith.cmpi ne, %10, %c0_i32_9 : i32
    scf.if %11 {
      %c0_10 = arith.constant 0 : index
      %c0_11 = arith.constant 0 : index
      %12 = vector.load %arg7[%c0_10, %c0_11] : memref<16x128xf32, #tpu.memory_space<vmem>>, vector<16x128xf32>
      %c0_12 = arith.constant 0 : index
      %c0_13 = arith.constant 0 : index
      %13 = vector.load %arg4[%c0_12, %c0_13] : memref<1x128xf32, #tpu.memory_space<vmem>>, vector<1x128xf32>
      %14 = vector.broadcast %13 : vector<1x128xf32> to vector<16x128xf32>
      %15 = arith.addf %12, %14 : vector<16x128xf32>
      %16 = arith.negf %15 : vector<16x128xf32>
      %17 = math.exp %16 : vector<16x128xf32>
      %cst_14 = arith.constant 1.000000e+00 : f32
      %18 = vector.broadcast %cst_14 : f32 to vector<16x128xf32>
      %19 = arith.addf %18, %17 : vector<16x128xf32>
      %20 = arith.divf %18, %19 : vector<16x128xf32>
      %c0_15 = arith.constant 0 : index
      %c0_16 = arith.constant 0 : index
      %21 = vector.load %arg5[%c0_15, %c0_16] : memref<128x128xf32, #tpu.memory_space<vmem>>, vector<128x128xf32>
      %cst_17 = arith.constant dense<0.000000e+00> : vector<16x128xf32>
      %22 = tpu.matmul %20, %21, %cst_17 {dimension_numbers = #tpu.dot_dimension_numbers<[1], [0], [0], [1], [0, 0, 1, 1], [], []>} : vector<16x128xf32>, vector<128x128xf32>, vector<16x128xf32> -> vector<16x128xf32>
      %c0_18 = arith.constant 0 : index
      %c0_19 = arith.constant 0 : index
      %23 = vector.load %arg6[%c0_18, %c0_19] : memref<16x128xf32, #tpu.memory_space<vmem>>, vector<16x128xf32>
      tpu.vector_store %arg6[%c0_18, %c0_19], %22 {strides = array<i32>} : memref<16x128xf32, #tpu.memory_space<vmem>>, vector<16x128xf32>,
    } else {
    }
    return
  }
  func.func @transform_0(%arg0: i32, %arg1: i32) -> (i32, i32) {
    %c0_i32 = arith.constant 0 : i32
    return %arg0, %arg1 : i32, i32
  }
  func.func @transform_1(%arg0: i32, %arg1: i32) -> (i32, i32) {
    %c0_i32 = arith.constant 0 : i32
    %c0_i32_0 = arith.constant 0 : i32
    return %arg1, %c0_i32 : i32, i32
  }
  func.func @transform_2(%arg0: i32, %arg1: i32) -> (i32, i32) {
    %c0_i32 = arith.constant 0 : i32
    %c0_i32_0 = arith.constant 0 : i32
    %c0_i32_1 = arith.constant 0 : i32
    return %c0_i32, %c0_i32_0 : i32, i32
  }
  func.func @transform_3(%arg0: i32, %arg1: i32) -> (i32, i32) {
    %c0_i32 = arith.constant 0 : i32
    %c0_i32_0 = arith.constant 0 : i32
    %c0_i32_1 = arith.constant 0 : i32
    return %c0_i32, %c0_i32_0 : i32, i32
  }
  func.func @transform_4(%arg0: i32, %arg1: i32) -> (i32, i32) {
    %c0_i32 = arith.constant 0 : i32
    %c0_i32_0 = arith.constant 0 : i32
    return %arg0, %c0_i32 : i32, i32
  }
}

</mosaic_0001>

<llo_original>
// kernel: tpu_custom_call.1
$region0: #{tpu_custom_call.1}
  #allocation0 [shape = 'u32[]', space=smem, size = 0x4, offset = 0x4, fixed_abs, tag = 'smem constant byte address 0x4 - core index']
  #allocation1 [shape = 'u32[144,128]{1,0:T(1,128)}', space=vmem, size = 0x12000, scoped, tag = 'internal scratch']
  #allocation2 [shape = 'f32[16,128]{1,0:T(8,128)}', space=vmem, size = 0x2000, scoped, tag = 'scratch operand']
  %s0 = inlined_call_operand.hbm [shape: bf16[16,1024], index: 0, kind: input, shape index: {}]
  %s1 = inlined_call_operand.hbm [shape: bf16[1024,128], index: 1, kind: input, shape index: {}]
  %s2 = inlined_call_operand.vmem [shape: f32[1,128], index: 2, kind: input, shape index: {}]
  %s3 = inlined_call_operand.hbm [shape: f32[128,128], index: 3, kind: input, shape index: {}]
  %s4 = inlined_call_operand.hbm [shape: f32[16,128], index: 4, kind: output, shape index: {}]
  %s5 = sld [smem:[#allocation0]]
  $region46: #{tpu_custom_call.1} parent=0
    _
  %s7 = ssub.s32 1, %s5
  %s8 = scalar_select 0, %s7, %s5
  $region1: #{tpu_custom_call.1} parent=0
    #allocation3 [shape = 'u8[32768]{0}', space=vmem, size = 0x8000, scoped, tag = 'input window, operand 0, single buffered']
    #allocation4 [shape = 's32[1]{0}', space=sflag, size = 0x4, scoped, tag = 'scoped memory for tpu_custom_call.1']
    #allocation5 [shape = 's32[1]{0}', space=sflag, size = 0x4, scoped, tag = 'scoped memory for tpu_custom_call.1']
    #allocation6 [shape = 'u8[262144]{0}', space=vmem, size = 0x40000, scoped, tag = 'input window, operand 1, single buffered']
    #allocation7 [shape = 's32[1]{0}', space=sflag, size = 0x4, scoped, tag = 'scoped memory for tpu_custom_call.1']
    #allocation8 [shape = 'u8[65536]{0}', space=vmem, size = 0x10000, scoped, tag = 'input window, operand 3, single buffered']
    #allocation9 [shape = 'u8[8192]{0}', space=vmem, size = 0x2000, scoped, tag = 'output window, operand 0, single buffered']
    %9 = vsyncpa [#allocation4], 0
    %10 = vsyncpa [#allocation7], 0
    %11 = vsyncpa [#allocation5], 0
    // Predicated region
    $region2: #{tpu_custom_call.1} parent=1 // pred_check
      _
    $region3: #{tpu_custom_call.1} parent=1 // pred_check_branch
      %13 = sbr.rel (0) target = $region5
    $region4: #{tpu_custom_call.1} parent=1 // pred_region
      %s15 = ssub.s32 1024, 1024
      %16 = vsyncadd [#allocation4], %s15
      %s17 = sshll.u32 [#allocation3], 4
      %s18 = int_to_ptr.vmem [resolvable:$true] %s17
      %23 = dma.hbm_to_vmem [thread:$0]  %s0, 1024, %s18, [#allocation4], 512, 512, 32
    $region5: #{tpu_custom_call.1} parent=1 // pred_fallthru
      _
    // Predicated region
    $region6: #{tpu_custom_call.1} parent=1 // pred_check
      _
    $region7: #{tpu_custom_call.1} parent=1 // pred_check_branch
      %25 = sbr.rel (0) target = $region9
    $region8: #{tpu_custom_call.1} parent=1 // pred_region
      %s27 = ssub.s32 8192, 8192
      %28 = vsyncadd [#allocation7], %s27
      %s29 = sshll.u32 [#allocation6], 4
      %s30 = int_to_ptr.vmem [resolvable:$true] %s29
      %35 = dma.hbm_to_vmem [thread:$0]  %s1, 8192, %s30, [#allocation7], 64, 64, 4
    $region9: #{tpu_custom_call.1} parent=1 // pred_fallthru
      _
    // Predicated region
    $region10: #{tpu_custom_call.1} parent=1 // pred_check
      _
    $region11: #{tpu_custom_call.1} parent=1 // pred_check_branch
      %37 = sbr.rel (0) target = $region13
    $region12: #{tpu_custom_call.1} parent=1 // pred_region
      _
    $region13: #{tpu_custom_call.1} parent=1 // pred_fallthru
      _
    // Predicated region
    $region14: #{tpu_custom_call.1} parent=1 // pred_check
      _
    $region15: #{tpu_custom_call.1} parent=1 // pred_check_branch
      %39 = sbr.rel (0) target = $region17
    $region16: #{tpu_custom_call.1} parent=1 // pred_region
      %s41 = ssub.s32 2048, 2048
      %42 = vsyncadd [#allocation7], %s41
      %s43 = sshll.u32 [#allocation8], 4
      %s44 = int_to_ptr.vmem [resolvable:$true] %s43
      %49 = dma.hbm_to_vmem [thread:$0]  %s3, 2048, %s44, [#allocation7], 128, 128, 8
    $region17: #{tpu_custom_call.1} parent=1 // pred_fallthru
      _
    // Predicated region
    $region18: #{tpu_custom_call.1} parent=1 // pred_check
      _
    $region19: #{tpu_custom_call.1} parent=1 // pred_check_branch
      %51 = sbr.rel (0) target = $region21
    $region20: #{tpu_custom_call.1} parent=1 // pred_region
      %52 = dma.done [#allocation4], 1024
    $region21: #{tpu_custom_call.1} parent=1 // pred_fallthru
      _
    // Predicated region
    $region22: #{tpu_custom_call.1} parent=1 // pred_check
      _
    $region23: #{tpu_custom_call.1} parent=1 // pred_check_branch
      %54 = sbr.rel (0) target = $region25
    $region24: #{tpu_custom_call.1} parent=1 // pred_region
      %55 = dma.done [#allocation7], 8192
    $region25: #{tpu_custom_call.1} parent=1 // pred_fallthru
      _
    // Predicated region
    $region26: #{tpu_custom_call.1} parent=1 // pred_check
      _
    $region27: #{tpu_custom_call.1} parent=1 // pred_check_branch
      %57 = sbr.rel (0) target = $region29
    $region28: #{tpu_custom_call.1} parent=1 // pred_region
      %58 = dma.done [#allocation7], 2048
    $region29: #{tpu_custom_call.1} parent=1 // pred_fallthru
      _
    %p60 = scmp.eq.s32.totalorder 0, 0
    // Predicated region
    $region30: #{tpu_custom_call.1} parent=1 // pred_check
      %p61 = pneg %p60
    $region31: #{tpu_custom_call.1} parent=1 // pred_check_branch
      %63 = sbr.rel (%p61) target = $region33
    $region32: #{tpu_custom_call.1} parent=1 // pred_region
      %64 = vst [vmem:[#allocation2] sm:$0xff] 0.0
      %65 = vst [vmem:[#allocation2 + $0x8] sm:$0xff] 0.0
    $region33: #{tpu_custom_call.1} parent=1 // pred_fallthru
      _
    %v66 = vld [vmem:[#allocation2] sm:$0xff]
    %v67 = vld [vmem:[#allocation2 + $0x8] sm:$0xff]
    %v68 = vld [vmem:[#allocation3] sm:$0xff]
    %v69 = vld [vmem:[#allocation3 + $0x8] sm:$0xff]
    %v70 = vld [vmem:[#allocation3 + $0x10] sm:$0xff]
    %v71 = vld [vmem:[#allocation3 + $0x18] sm:$0xff]
    %v72 = vld [vmem:[#allocation3 + $0x20] sm:$0xff]
    %v73 = vld [vmem:[#allocation3 + $0x28] sm:$0xff]
    %v74 = vld [vmem:[#allocation3 + $0x30] sm:$0xff]
    %v75 = vld [vmem:[#allocation3 + $0x38] sm:$0xff]
    %v76 = vld [vmem:[#allocation6] sm:$0xf]
    %v77 = vld [vmem:[#allocation6 + $0x4] sm:$0xf]
    %v78 = vld [vmem:[#allocation6 + $0x8] sm:$0xf]
    %v79 = vld [vmem:[#allocation6 + $0xc] sm:$0xf]
    %v80 = vld [vmem:[#allocation6 + $0x10] sm:$0xf]
    %v81 = vld [vmem:[#allocation6 + $0x14] sm:$0xf]
    %v82 = vld [vmem:[#allocation6 + $0x18] sm:$0xf]
    %v83 = vld [vmem:[#allocation6 + $0x1c] sm:$0xf]
    %v84 = vld [vmem:[#allocation6 + $0x20] sm:$0xf]
    %v85 = vld [vmem:[#allocation6 + $0x24] sm:$0xf]
    %v86 = vld [vmem:[#allocation6 + $0x28] sm:$0xf]
    %v87 = vld [vmem:[#allocation6 + $0x2c] sm:$0xf]
    %v88 = vld [vmem:[#allocation6 + $0x30] sm:$0xf]
    %v89 = vld [vmem:[#allocation6 + $0x34] sm:$0xf]
    %v90 = vld [vmem:[#allocation6 + $0x38] sm:$0xf]
    %v91 = vld [vmem:[#allocation6 + $0x3c] sm:$0xf]
    %v92 = vld [vmem:[#allocation6 + $0x40] sm:$0xf]
    %v93 = vld [vmem:[#allocation6 + $0x44] sm:$0xf]
    %v94 = vld [vmem:[#allocation6 + $0x48] sm:$0xf]
    %v95 = vld [vmem:[#allocation6 + $0x4c] sm:$0xf]
    %v96 = vld [vmem:[#allocation6 + $0x50] sm:$0xf]
    %v97 = vld [vmem:[#allocation6 + $0x54] sm:$0xf]
    %v98 = vld [vmem:[#allocation6 + $0x58] sm:$0xf]
    %v99 = vld [vmem:[#allocation6 + $0x5c] sm:$0xf]
    %v100 = vld [vmem:[#allocation6 + $0x60] sm:$0xf]
    %v101 = vld [vmem:[#allocation6 + $0x64] sm:$0xf]
    %v102 = vld [vmem:[#allocation6 + $0x68] sm:$0xf]
    %v103 = vld [vmem:[#allocation6 + $0x6c] sm:$0xf]
    %v104 = vld [vmem:[#allocation6 + $0x70] sm:$0xf]
    %v105 = vld [vmem:[#allocation6 + $0x74] sm:$0xf]
    %v106 = vld [vmem:[#allocation6 + $0x78] sm:$0xf]
    %v107 = vld [vmem:[#allocation6 + $0x7c] sm:$0xf]
    %v108 = vld [vmem:[#allocation6 + $0x80] sm:$0xf]
    %v109 = vld [vmem:[#allocation6 + $0x84] sm:$0xf]
    %v110 = vld [vmem:[#allocation6 + $0x88] sm:$0xf]
    %v111 = vld [vmem:[#allocation6 + $0x8c] sm:$0xf]
    %v112 = vld [vmem:[#allocation6 + $0x90] sm:$0xf]
    %v113 = vld [vmem:[#allocation6 + $0x94] sm:$0xf]
    %v114 = vld [vmem:[#allocation6 + $0x98] sm:$0xf]
    %v115 = vld [vmem:[#allocation6 + $0x9c] sm:$0xf]
    %v116 = vld [vmem:[#allocation6 + $0xa0] sm:$0xf]
    %v117 = vld [vmem:[#allocation6 + $0xa4] sm:$0xf]
    %v118 = vld [vmem:[#allocation6 + $0xa8] sm:$0xf]
    %v119 = vld [vmem:[#allocation6 + $0xac] sm:$0xf]
    %v120 = vld [vmem:[#allocation6 + $0xb0] sm:$0xf]
    %v121 = vld [vmem:[#allocation6 + $0xb4] sm:$0xf]
    %v122 = vld [vmem:[#allocation6 + $0xb8] sm:$0xf]
    %v123 = vld [vmem:[#allocation6 + $0xbc] sm:$0xf]
    %v124 = vld [vmem:[#allocation6 + $0xc0] sm:$0xf]
    %v125 = vld [vmem:[#allocation6 + $0xc4] sm:$0xf]
    %v126 = vld [vmem:[#allocation6 + $0xc8] sm:$0xf]
    %v127 = vld [vmem:[#allocation6 + $0xcc] sm:$0xf]
    %v128 = vld [vmem:[#allocation6 + $0xd0] sm:$0xf]
    %v129 = vld [vmem:[#allocation6 + $0xd4] sm:$0xf]
    %v130 = vld [vmem:[#allocation6 + $0xd8] sm:$0xf]
    %v131 = vld [vmem:[#allocation6 + $0xdc] sm:$0xf]
    %v132 = vld [vmem:[#allocation6 + $0xe0] sm:$0xf]
    %v133 = vld [vmem:[#allocation6 + $0xe4] sm:$0xf]
    %v134 = vld [vmem:[#allocation6 + $0xe8] sm:$0xf]
    %v135 = vld [vmem:[#allocation6 + $0xec] sm:$0xf]
    %v136 = vld [vmem:[#allocation6 + $0xf0] sm:$0xf]
    %v137 = vld [vmem:[#allocation6 + $0xf4] sm:$0xf]
    %v138 = vld [vmem:[#allocation6 + $0xf8] sm:$0xf]
    %v139 = vld [vmem:[#allocation6 + $0xfc] sm:$0xf]
    %v140 = vld [vmem:[#allocation6 + $0x100] sm:$0xf]
    %v141 = vld [vmem:[#allocation6 + $0x104] sm:$0xf]
    %v142 = vld [vmem:[#allocation6 + $0x108] sm:$0xf]
    %v143 = vld [vmem:[#allocation6 + $0x10c] sm:$0xf]
    %v144 = vld [vmem:[#allocation6 + $0x110] sm:$0xf]
    %v145 = vld [vmem:[#allocation6 + $0x114] sm:$0xf]
    %v146 = vld [vmem:[#allocation6 + $0x118] sm:$0xf]
    %v147 = vld [vmem:[#allocation6 + $0x11c] sm:$0xf]
    %v148 = vld [vmem:[#allocation6 + $0x120] sm:$0xf]
    %v149 = vld [vmem:[#allocation6 + $0x124] sm:$0xf]
    %v150 = vld [vmem:[#allocation6 + $0x128] sm:$0xf]
    %v151 = vld [vmem:[#allocation6 + $0x12c] sm:$0xf]
    %v152 = vld [vmem:[#allocation6 + $0x130] sm:$0xf]
    %v153 = vld [vmem:[#allocation6 + $0x134] sm:$0xf]
    %v154 = vld [vmem:[#allocation6 + $0x138] sm:$0xf]
    %v155 = vld [vmem:[#allocation6 + $0x13c] sm:$0xf]
    %v156 = vld [vmem:[#allocation6 + $0x140] sm:$0xf]
    %v157 = vld [vmem:[#allocation6 + $0x144] sm:$0xf]
    %v158 = vld [vmem:[#allocation6 + $0x148] sm:$0xf]
    %v159 = vld [vmem:[#allocation6 + $0x14c] sm:$0xf]
    %v160 = vld [vmem:[#allocation6 + $0x150] sm:$0xf]
    %v161 = vld [vmem:[#allocation6 + $0x154] sm:$0xf]
    %v162 = vld [vmem:[#allocation6 + $0x158] sm:$0xf]
    %v163 = vld [vmem:[#allocation6 + $0x15c] sm:$0xf]
    %v164 = vld [vmem:[#allocation6 + $0x160] sm:$0xf]
    %v165 = vld [vmem:[#allocation6 + $0x164] sm:$0xf]
    %v166 = vld [vmem:[#allocation6 + $0x168] sm:$0xf]
    %v167 = vld [vmem:[#allocation6 + $0x16c] sm:$0xf]
    %v168 = vld [vmem:[#allocation6 + $0x170] sm:$0xf]
    %v169 = vld [vmem:[#allocation6 + $0x174] sm:$0xf]
    %v170 = vld [vmem:[#allocation6 + $0x178] sm:$0xf]
    %v171 = vld [vmem:[#allocation6 + $0x17c] sm:$0xf]
    %v172 = vld [vmem:[#allocation6 + $0x180] sm:$0xf]
    %v173 = vld [vmem:[#allocation6 + $0x184] sm:$0xf]
    %v174 = vld [vmem:[#allocation6 + $0x188] sm:$0xf]
    %v175 = vld [vmem:[#allocation6 + $0x18c] sm:$0xf]
    %v176 = vld [vmem:[#allocation6 + $0x190] sm:$0xf]
    %v177 = vld [vmem:[#allocation6 + $0x194] sm:$0xf]
    %v178 = vld [vmem:[#allocation6 + $0x198] sm:$0xf]
    %v179 = vld [vmem:[#allocation6 + $0x19c] sm:$0xf]
    %v180 = vld [vmem:[#allocation6 + $0x1a0] sm:$0xf]
    %v181 = vld [vmem:[#allocation6 + $0x1a4] sm:$0xf]
    %v182 = vld [vmem:[#allocation6 + $0x1a8] sm:$0xf]
    %v183 = vld [vmem:[#allocation6 + $0x1ac] sm:$0xf]
    %v184 = vld [vmem:[#allocation6 + $0x1b0] sm:$0xf]
    %v185 = vld [vmem:[#allocation6 + $0x1b4] sm:$0xf]
    %v186 = vld [vmem:[#allocation6 + $0x1b8] sm:$0xf]
    %v187 = vld [vmem:[#allocation6 + $0x1bc] sm:$0xf]
    %v188 = vld [vmem:[#allocation6 + $0x1c0] sm:$0xf]
    %v189 = vld [vmem:[#allocation6 + $0x1c4] sm:$0xf]
    %v190 = vld [vmem:[#allocation6 + $0x1c8] sm:$0xf]
    %v191 = vld [vmem:[#allocation6 + $0x1cc] sm:$0xf]
    %v192 = vld [vmem:[#allocation6 + $0x1d0] sm:$0xf]
    %v193 = vld [vmem:[#allocation6 + $0x1d4] sm:$0xf]
    %v194 = vld [vmem:[#allocation6 + $0x1d8] sm:$0xf]
    %v195 = vld [vmem:[#allocation6 + $0x1dc] sm:$0xf]
    %v196 = vld [vmem:[#allocation6 + $0x1e0] sm:$0xf]
    %v197 = vld [vmem:[#allocation6 + $0x1e4] sm:$0xf]
    %v198 = vld [vmem:[#allocation6 + $0x1e8] sm:$0xf]
    %v199 = vld [vmem:[#allocation6 + $0x1ec] sm:$0xf]
    %v200 = vld [vmem:[#allocation6 + $0x1f0] sm:$0xf]
    %v201 = vld [vmem:[#allocation6 + $0x1f4] sm:$0xf]
    %v202 = vld [vmem:[#allocation6 + $0x1f8] sm:$0xf]
    %v203 = vld [vmem:[#allocation6 + $0x1fc] sm:$0xf]
    %v212 = vunpack.c.l.b16 %v68
    %v213 = vunpack.c.h.b16 %v68
    %v214 = vunpack.c.l.b16 %v69
    %v215 = vunpack.c.h.b16 %v69
    %v216 = vunpack.c.l.b16 %v70
    %v217 = vunpack.c.h.b16 %v70
    %v218 = vunpack.c.l.b16 %v71
    %v219 = vunpack.c.h.b16 %v71
    %v220 = vunpack.c.l.b16 %v72
    %v221 = vunpack.c.h.b16 %v72
    %v222 = vunpack.c.l.b16 %v73
    %v223 = vunpack.c.h.b16 %v73
    %v224 = vunpack.c.l.b16 %v74
    %v225 = vunpack.c.h.b16 %v74
    %v226 = vunpack.c.l.b16 %v75
    %v227 = vunpack.c.h.b16 %v75
    %v228 = vpack.c.b16 %v220, %v212
    %v229 = vpack.c.b16 %v221, %v213
    %v230 = vpack.c.b16 %v222, %v214
    %v231 = vpack.c.b16 %v223, %v215
    %v232 = vpack.c.b16 %v224, %v216
    %v233 = vpack.c.b16 %v225, %v217
    %v234 = vpack.c.b16 %v226, %v218
    %v235 = vpack.c.b16 %v227, %v219
    %v372 = vunpack.c.l.b16 %v76
    %v373 = vunpack.c.l.b16 %v77
    %v374 = vunpack.c.l.b16 %v78
    %v375 = vunpack.c.l.b16 %v79
    %v376 = vunpack.c.l.b16 %v80
    %v377 = vunpack.c.l.b16 %v81
    %v378 = vunpack.c.l.b16 %v82
    %v379 = vunpack.c.l.b16 %v83
    %v380 = vunpack.c.l.b16 %v84
    %v381 = vunpack.c.l.b16 %v85
    %v382 = vunpack.c.l.b16 %v86
    %v383 = vunpack.c.l.b16 %v87
    %v384 = vunpack.c.l.b16 %v88
    %v385 = vunpack.c.l.b16 %v89
    %v386 = vunpack.c.l.b16 %v90
    %v387 = vunpack.c.l.b16 %v91
    %v388 = vunpack.c.l.b16 %v92
    %v389 = vunpack.c.l.b16 %v93
    %v390 = vunpack.c.l.b16 %v94
    %v391 = vunpack.c.l.b16 %v95
    %v392 = vunpack.c.l.b16 %v96
    %v393 = vunpack.c.l.b16 %v97
    %v394 = vunpack.c.l.b16 %v98
    %v395 = vunpack.c.l.b16 %v99
    %v396 = vunpack.c.l.b16 %v100
    %v397 = vunpack.c.l.b16 %v101
    %v398 = vunpack.c.l.b16 %v102
    %v399 = vunpack.c.l.b16 %v103
    %v400 = vunpack.c.l.b16 %v104
    %v401 = vunpack.c.l.b16 %v105
    %v402 = vunpack.c.l.b16 %v106
    %v403 = vunpack.c.l.b16 %v107
    %v404 = vunpack.c.l.b16 %v108
    %v405 = vunpack.c.l.b16 %v109
    %v406 = vunpack.c.l.b16 %v110
    %v407 = vunpack.c.l.b16 %v111
    %v408 = vunpack.c.l.b16 %v112
    %v409 = vunpack.c.l.b16 %v113
    %v410 = vunpack.c.l.b16 %v114
    %v411 = vunpack.c.l.b16 %v115
    %v412 = vunpack.c.l.b16 %v116
    %v413 = vunpack.c.l.b16 %v117
    %v414 = vunpack.c.l.b16 %v118
    %v415 = vunpack.c.l.b16 %v119
    %v416 = vunpack.c.l.b16 %v120
    %v417 = vunpack.c.l.b16 %v121
    %v418 = vunpack.c.l.b16 %v122
    %v419 = vunpack.c.l.b16 %v123
    %v420 = vunpack.c.l.b16 %v124
    %v421 = vunpack.c.l.b16 %v125
    %v422 = vunpack.c.l.b16 %v126
    %v423 = vunpack.c.l.b16 %v127
    %v424 = vunpack.c.l.b16 %v128
    %v425 = vunpack.c.l.b16 %v129
    %v426 = vunpack.c.l.b16 %v130
    %v427 = vunpack.c.l.b16 %v131
    %v428 = vunpack.c.l.b16 %v132
    %v429 = vunpack.c.l.b16 %v133
    %v430 = vunpack.c.l.b16 %v134
    %v431 = vunpack.c.l.b16 %v135
    %v432 = vunpack.c.l.b16 %v136
    %v433 = vunpack.c.l.b16 %v137
    %v434 = vunpack.c.l.b16 %v138
    %v435 = vunpack.c.l.b16 %v139
    %v436 = vunpack.c.l.b16 %v140
    %v437 = vunpack.c.l.b16 %v141
    %v438 = vunpack.c.l.b16 %v142
    %v439 = vunpack.c.l.b16 %v143
    %v440 = vunpack.c.l.b16 %v144
    %v441 = vunpack.c.l.b16 %v145
    %v442 = vunpack.c.l.b16 %v146
    %v443 = vunpack.c.l.b16 %v147
    %v444 = vunpack.c.l.b16 %v148
    %v445 = vunpack.c.l.b16 %v149
    %v446 = vunpack.c.l.b16 %v150
    %v447 = vunpack.c.l.b16 %v151
    %v448 = vunpack.c.l.b16 %v152
    %v449 = vunpack.c.l.b16 %v153
    %v450 = vunpack.c.l.b16 %v154
    %v451 = vunpack.c.l.b16 %v155
    %v452 = vunpack.c.l.b16 %v156
    %v453 = vunpack.c.l.b16 %v157
    %v454 = vunpack.c.l.b16 %v158
    %v455 = vunpack.c.l.b16 %v159
    %v456 = vunpack.c.l.b16 %v160
    %v457 = vunpack.c.l.b16 %v161
    %v458 = vunpack.c.l.b16 %v162
    %v459 = vunpack.c.l.b16 %v163
    %v460 = vunpack.c.l.b16 %v164
    %v461 = vunpack.c.l.b16 %v165
    %v462 = vunpack.c.l.b16 %v166
    %v463 = vunpack.c.l.b16 %v167
    %v464 = vunpack.c.l.b16 %v168
    %v465 = vunpack.c.l.b16 %v169
    %v466 = vunpack.c.l.b16 %v170
    %v467 = vunpack.c.l.b16 %v171
    %v468 = vunpack.c.l.b16 %v172
    %v469 = vunpack.c.l.b16 %v173
    %v470 = vunpack.c.l.b16 %v174
    %v471 = vunpack.c.l.b16 %v175
    %v472 = vunpack.c.l.b16 %v176
    %v473 = vunpack.c.l.b16 %v177
    %v474 = vunpack.c.l.b16 %v178
    %v475 = vunpack.c.l.b16 %v179
    %v476 = vunpack.c.l.b16 %v180
    %v477 = vunpack.c.l.b16 %v181
    %v478 = vunpack.c.l.b16 %v182
    %v479 = vunpack.c.l.b16 %v183
    %v480 = vunpack.c.l.b16 %v184
    %v481 = vunpack.c.l.b16 %v185
    %v482 = vunpack.c.l.b16 %v186
    %v483 = vunpack.c.l.b16 %v187
    %v484 = vunpack.c.l.b16 %v188
    %v485 = vunpack.c.l.b16 %v189
    %v486 = vunpack.c.l.b16 %v190
    %v487 = vunpack.c.l.b16 %v191
    %v488 = vunpack.c.l.b16 %v192
    %v489 = vunpack.c.l.b16 %v193
    %v490 = vunpack.c.l.b16 %v194
    %v491 = vunpack.c.l.b16 %v195
    %v492 = vunpack.c.l.b16 %v196
    %v493 = vunpack.c.l.b16 %v197
    %v494 = vunpack.c.l.b16 %v198
    %v495 = vunpack.c.l.b16 %v199
    %v496 = vunpack.c.l.b16 %v200
    %v497 = vunpack.c.l.b16 %v201
    %v498 = vunpack.c.l.b16 %v202
    %v499 = vunpack.c.l.b16 %v203
    %v500 = vpack.c.b16 %v373, %v372
    %v501 = vpack.c.b16 %v375, %v374
    %v502 = vpack.c.b16 %v377, %v376
    %v503 = vpack.c.b16 %v379, %v378
    %v504 = vpack.c.b16 %v381, %v380
    %v505 = vpack.c.b16 %v383, %v382
    %v506 = vpack.c.b16 %v385, %v384
    %v507 = vpack.c.b16 %v387, %v386
    %v508 = vpack.c.b16 %v389, %v388
    %v509 = vpack.c.b16 %v391, %v390
    %v510 = vpack.c.b16 %v393, %v392
    %v511 = vpack.c.b16 %v395, %v394
    %v512 = vpack.c.b16 %v397, %v396
    %v513 = vpack.c.b16 %v399, %v398
    %v514 = vpack.c.b16 %v401, %v400
    %v515 = vpack.c.b16 %v403, %v402
    %v516 = vpack.c.b16 %v405, %v404
    %v517 = vpack.c.b16 %v407, %v406
    %v518 = vpack.c.b16 %v409, %v408
    %v519 = vpack.c.b16 %v411, %v410
    %v520 = vpack.c.b16 %v413, %v412
    %v521 = vpack.c.b16 %v415, %v414
    %v522 = vpack.c.b16 %v417, %v416
    %v523 = vpack.c.b16 %v419, %v418
    %v524 = vpack.c.b16 %v421, %v420
    %v525 = vpack.c.b16 %v423, %v422
    %v526 = vpack.c.b16 %v425, %v424
    %v527 = vpack.c.b16 %v427, %v426
    %v528 = vpack.c.b16 %v429, %v428
    %v529 = vpack.c.b16 %v431, %v430
    %v530 = vpack.c.b16 %v433, %v432
    %v531 = vpack.c.b16 %v435, %v434
    %v532 = vpack.c.b16 %v437, %v436
    %v533 = vpack.c.b16 %v439, %v438
    %v534 = vpack.c.b16 %v441, %v440
    %v535 = vpack.c.b16 %v443, %v442
    %v536 = vpack.c.b16 %v445, %v444
    %v537 = vpack.c.b16 %v447, %v446
    %v538 = vpack.c.b16 %v449, %v448
    %v539 = vpack.c.b16 %v451, %v450
    %v540 = vpack.c.b16 %v453, %v452
    %v541 = vpack.c.b16 %v455, %v454
    %v542 = vpack.c.b16 %v457, %v456
    %v543 = vpack.c.b16 %v459, %v458
    %v544 = vpack.c.b16 %v461, %v460
    %v545 = vpack.c.b16 %v463, %v462
    %v546 = vpack.c.b16 %v465, %v464
    %v547 = vpack.c.b16 %v467, %v466
    %v548 = vpack.c.b16 %v469, %v468
    %v549 = vpack.c.b16 %v471, %v470
    %v550 = vpack.c.b16 %v473, %v472
    %v551 = vpack.c.b16 %v475, %v474
    %v552 = vpack.c.b16 %v477, %v476
    %v553 = vpack.c.b16 %v479, %v478
    %v554 = vpack.c.b16 %v481, %v480
    %v555 = vpack.c.b16 %v483, %v482
    %v556 = vpack.c.b16 %v485, %v484
    %v557 = vpack.c.b16 %v487, %v486
    %v558 = vpack.c.b16 %v489, %v488
    %v559 = vpack.c.b16 %v491, %v490
    %v560 = vpack.c.b16 %v493, %v492
    %v561 = vpack.c.b16 %v495, %v494
    %v562 = vpack.c.b16 %v497, %v496
    %v563 = vpack.c.b16 %v499, %v498
    %628 = vmatprep.subr.bf16.mxu0 0
    %629 = vmatpush1.bf16.msra.mxu0 %v500
    %630 = vmatprep.subr.bf16.mxu0 0
    %631 = vmatpush1.bf16.msra.mxu0 %v501
    %632 = vmatprep.subr.bf16.mxu0 0
    %633 = vmatpush1.bf16.msra.mxu0 %v502
    %634 = vmatprep.subr.bf16.mxu0 0
    %635 = vmatpush1.bf16.msra.mxu0 %v503
    %636 = vmatprep.subr.bf16.mxu0 0
    %637 = vmatpush1.bf16.msra.mxu0 %v504
    %638 = vmatprep.subr.bf16.mxu0 0
    %639 = vmatpush1.bf16.msra.mxu0 %v505
    %640 = vmatprep.subr.bf16.mxu0 0
    %641 = vmatpush1.bf16.msra.mxu0 %v506
    %642 = vmatprep.subr.bf16.mxu0 0
    %643 = vmatpush1.bf16.msra.mxu0 %v507
    %644 = vmatprep.subr.bf16.mxu0 0
    %645 = vmatpush1.bf16.msra.mxu0 %v508
    %646 = vmatprep.subr.bf16.mxu0 0
    %647 = vmatpush1.bf16.msra.mxu0 %v509
    %648 = vmatprep.subr.bf16.mxu0 0
    %649 = vmatpush1.bf16.msra.mxu0 %v510
    %650 = vmatprep.subr.bf16.mxu0 0
    %651 = vmatpush1.bf16.msra.mxu0 %v511
    %652 = vmatprep.subr.bf16.mxu0 0
    %653 = vmatpush1.bf16.msra.mxu0 %v512
    %654 = vmatprep.subr.bf16.mxu0 0
    %655 = vmatpush1.bf16.msra.mxu0 %v513
    %656 = vmatprep.subr.bf16.mxu0 0
    %657 = vmatpush1.bf16.msra.mxu0 %v514
    %658 = vmatprep.subr.bf16.mxu0 0
    %659 = vmatpush1.bf16.msra.mxu0 %v515
    %660 = vmatprep.mubr.bf16.mxu0 %v229
    %661 = vmatmul.mubr.bf16.gmra.mrb[0].mxu0 %v228
    %v662 = vpop.f32.mrb[0].mxu0
    %v663 = vadd.f32 0.0, %v662
    %v664 = vpop.f32.mrb[0].mxu0
    %v665 = vpop.f32.mrb[0].mxu0
    %v666 = vadd.f32 0.0, %v665
    %v667 = vpop.f32.mrb[0].mxu0
    %668 = vdwg.mxu0
    %669 = vmatprep.subr.bf16.mxu0 0
    %670 = vmatpush1.bf16.msra.mxu0 %v516
    %671 = vmatprep.subr.bf16.mxu0 0
    %672 = vmatpush1.bf16.msra.mxu0 %v517
    %673 = vmatprep.subr.bf16.mxu0 0
    %674 = vmatpush1.bf16.msra.mxu0 %v518
    %675 = vmatprep.subr.bf16.mxu0 0
    %676 = vmatpush1.bf16.msra.mxu0 %v519
    %677 = vmatprep.subr.bf16.mxu0 0
    %678 = vmatpush1.bf16.msra.mxu0 %v520
    %679 = vmatprep.subr.bf16.mxu0 0
    %680 = vmatpush1.bf16.msra.mxu0 %v521
    %681 = vmatprep.subr.bf16.mxu0 0
    %682 = vmatpush1.bf16.msra.mxu0 %v522
    %683 = vmatprep.subr.bf16.mxu0 0
    %684 = vmatpush1.bf16.msra.mxu0 %v523
    %685 = vmatprep.subr.bf16.mxu0 0
    %686 = vmatpush1.bf16.msra.mxu0 %v524
    %687 = vmatprep.subr.bf16.mxu0 0
    %688 = vmatpush1.bf16.msra.mxu0 %v525
    %689 = vmatprep.subr.bf16.mxu0 0
    %690 = vmatpush1.bf16.msra.mxu0 %v526
    %691 = vmatprep.subr.bf16.mxu0 0
    %692 = vmatpush1.bf16.msra.mxu0 %v527
    %693 = vmatprep.subr.bf16.mxu0 0
    %694 = vmatpush1.bf16.msra.mxu0 %v528
    %695 = vmatprep.subr.bf16.mxu0 0
    %696 = vmatpush1.bf16.msra.mxu0 %v529
    %697 = vmatprep.subr.bf16.mxu0 0
    %698 = vmatpush1.bf16.msra.mxu0 %v530
    %699 = vmatprep.subr.bf16.mxu0 0
    %700 = vmatpush1.bf16.msra.mxu0 %v531
    %701 = vmatprep.mubr.bf16.mxu0 %v231
    %702 = vmatmul.mubr.bf16.gmra.mrb[0].mxu0 %v230
    %v703 = vpop.f32.mrb[0].mxu0
    %v704 = vadd.f32 %v663, %v703
    %v705 = vpop.f32.mrb[0].mxu0
    %v706 = vpop.f32.mrb[0].mxu0
    %v707 = vadd.f32 %v666, %v706
    %v708 = vpop.f32.mrb[0].mxu0
    %709 = vdwg.mxu0
    %710 = vmatprep.subr.bf16.mxu0 0
    %711 = vmatpush1.bf16.msra.mxu0 %v532
    %712 = vmatprep.subr.bf16.mxu0 0
    %713 = vmatpush1.bf16.msra.mxu0 %v533
    %714 = vmatprep.subr.bf16.mxu0 0
    %715 = vmatpush1.bf16.msra.mxu0 %v534
    %716 = vmatprep.subr.bf16.mxu0 0
    %717 = vmatpush1.bf16.msra.mxu0 %v535
    %718 = vmatprep.subr.bf16.mxu0 0
    %719 = vmatpush1.bf16.msra.mxu0 %v536
    %720 = vmatprep.subr.bf16.mxu0 0
    %721 = vmatpush1.bf16.msra.mxu0 %v537
    %722 = vmatprep.subr.bf16.mxu0 0
    %723 = vmatpush1.bf16.msra.mxu0 %v538
    %724 = vmatprep.subr.bf16.mxu0 0
    %725 = vmatpush1.bf16.msra.mxu0 %v539
    %726 = vmatprep.subr.bf16.mxu0 0
    %727 = vmatpush1.bf16.msra.mxu0 %v540
    %728 = vmatprep.subr.bf16.mxu0 0
    %729 = vmatpush1.bf16.msra.mxu0 %v541
    %730 = vmatprep.subr.bf16.mxu0 0
    %731 = vmatpush1.bf16.msra.mxu0 %v542
    %732 = vmatprep.subr.bf16.mxu0 0
    %733 = vmatpush1.bf16.msra.mxu0 %v543
    %734 = vmatprep.subr.bf16.mxu0 0
    %735 = vmatpush1.bf16.msra.mxu0 %v544
    %736 = vmatprep.subr.bf16.mxu0 0
    %737 = vmatpush1.bf16.msra.mxu0 %v545
    %738 = vmatprep.subr.bf16.mxu0 0
    %739 = vmatpush1.bf16.msra.mxu0 %v546
    %740 = vmatprep.subr.bf16.mxu0 0
    %741 = vmatpush1.bf16.msra.mxu0 %v547
    %742 = vmatprep.mubr.bf16.mxu0 %v233
    %743 = vmatmul.mubr.bf16.gmra.mrb[0].mxu0 %v232
    %v744 = vpop.f32.mrb[0].mxu0
    %v745 = vadd.f32 %v704, %v744
    %v746 = vpop.f32.mrb[0].mxu0
    %v747 = vpop.f32.mrb[0].mxu0
    %v748 = vadd.f32 %v707, %v747
    %v749 = vpop.f32.mrb[0].mxu0
    %750 = vdwg.mxu0
    %751 = vmatprep.subr.bf16.mxu0 0
    %752 = vmatpush1.bf16.msra.mxu0 %v548
    %753 = vmatprep.subr.bf16.mxu0 0
    %754 = vmatpush1.bf16.msra.mxu0 %v549
    %755 = vmatprep.subr.bf16.mxu0 0
    %756 = vmatpush1.bf16.msra.mxu0 %v550
    %757 = vmatprep.subr.bf16.mxu0 0
    %758 = vmatpush1.bf16.msra.mxu0 %v551
    %759 = vmatprep.subr.bf16.mxu0 0
    %760 = vmatpush1.bf16.msra.mxu0 %v552
    %761 = vmatprep.subr.bf16.mxu0 0
    %762 = vmatpush1.bf16.msra.mxu0 %v553
    %763 = vmatprep.subr.bf16.mxu0 0
    %764 = vmatpush1.bf16.msra.mxu0 %v554
    %765 = vmatprep.subr.bf16.mxu0 0
    %766 = vmatpush1.bf16.msra.mxu0 %v555
    %767 = vmatprep.subr.bf16.mxu0 0
    %768 = vmatpush1.bf16.msra.mxu0 %v556
    %769 = vmatprep.subr.bf16.mxu0 0
    %770 = vmatpush1.bf16.msra.mxu0 %v557
    %771 = vmatprep.subr.bf16.mxu0 0
    %772 = vmatpush1.bf16.msra.mxu0 %v558
    %773 = vmatprep.subr.bf16.mxu0 0
    %774 = vmatpush1.bf16.msra.mxu0 %v559
    %775 = vmatprep.subr.bf16.mxu0 0
    %776 = vmatpush1.bf16.msra.mxu0 %v560
    %777 = vmatprep.subr.bf16.mxu0 0
    %778 = vmatpush1.bf16.msra.mxu0 %v561
    %779 = vmatprep.subr.bf16.mxu0 0
    %780 = vmatpush1.bf16.msra.mxu0 %v562
    %781 = vmatprep.subr.bf16.mxu0 0
    %782 = vmatpush1.bf16.msra.mxu0 %v563
    %783 = vmatprep.mubr.bf16.mxu0 %v235
    %784 = vmatmul.mubr.bf16.gmra.mrb[0].mxu0 %v234
    %v785 = vpop.f32.mrb[0].mxu0
    %v786 = vadd.f32 %v745, %v785
    %v787 = vpop.f32.mrb[0].mxu0
    %v788 = vpop.f32.mrb[0].mxu0
    %v789 = vadd.f32 %v748, %v788
    %v790 = vpop.f32.mrb[0].mxu0
    %791 = vdwg.mxu0
    %v792 = vadd.f32 %v66, %v786
    %v793 = vadd.f32 %v67, %v789
    %794 = vst [vmem:[#allocation2] sm:$0xff] %v792
    %795 = vst [vmem:[#allocation2 + $0x8] sm:$0xff] %v793
    // Predicated region
    $region34: #{tpu_custom_call.1} parent=1 // pred_check
      %p796 = pneg %p60
    $region35: #{tpu_custom_call.1} parent=1 // pred_check_branch
      %798 = sbr.rel (%p796) target = $region37
    $region36: #{tpu_custom_call.1} parent=1 // pred_region
      %v799 = vld [vmem:[#allocation2] sm:$0xff]
      %v800 = vld [vmem:[#allocation2 + $0x8] sm:$0xff]
      %v801 = vld [vmem:[%s2] sm:$0x1]
      %v803 = vlaneseq
      %v804 = vshrl.u32 %v803, 7
      %v805 = vsub.s32 0, %v804
      %v806 = vrot.slane %v801, %v805
      %v808 = vadd.f32 %v799, %v806
      %v809 = vadd.f32 %v800, %v806
      %v810 = vxor.u32 %v808, 2147483648
      %v811 = vxor.u32 %v809, 2147483648
      %v812 = vmul.f32 %v810, 1.442695
      %v813 = vpow.pop %v812
      %v814 = vmul.f32 %v811, 1.442695
      %v815 = vpow.pop %v814
      %v816 = vadd.f32 %v813, 1.0
      %v817 = vadd.f32 %v815, 1.0
      %v818 = vrcp.pop %v816
      %v819 = vmul.f32 1.0, %v818
      %v820 = vrcp.pop %v817
      %v821 = vmul.f32 1.0, %v820
      %v822 = vld [vmem:[#allocation8] sm:$0xff]
      %v823 = vld [vmem:[#allocation8 + $0x8] sm:$0xff]
      %v824 = vld [vmem:[#allocation8 + $0x10] sm:$0xff]
      %v825 = vld [vmem:[#allocation8 + $0x18] sm:$0xff]
      %v826 = vld [vmem:[#allocation8 + $0x20] sm:$0xff]
      %v827 = vld [vmem:[#allocation8 + $0x28] sm:$0xff]
      %v828 = vld [vmem:[#allocation8 + $0x30] sm:$0xff]
      %v829 = vld [vmem:[#allocation8 + $0x38] sm:$0xff]
      %v830 = vld [vmem:[#allocation8 + $0x40] sm:$0xff]
      %v831 = vld [vmem:[#allocation8 + $0x48] sm:$0xff]
      %v832 = vld [vmem:[#allocation8 + $0x50] sm:$0xff]
      %v833 = vld [vmem:[#allocation8 + $0x58] sm:$0xff]
      %v834 = vld [vmem:[#allocation8 + $0x60] sm:$0xff]
      %v835 = vld [vmem:[#allocation8 + $0x68] sm:$0xff]
      %v836 = vld [vmem:[#allocation8 + $0x70] sm:$0xff]
      %v837 = vld [vmem:[#allocation8 + $0x78] sm:$0xff]
      %838 = vmatprep.subr.mxu0 0.0
      %839 = vmatpush1.msra.mxu0 %v822
      %840 = vmatprep.subr.mxu0 0.0
      %841 = vmatpush1.msra.mxu0 %v823
      %842 = vmatprep.subr.mxu0 0.0
      %843 = vmatpush1.msra.mxu0 %v824
      %844 = vmatprep.subr.mxu0 0.0
      %845 = vmatpush1.msra.mxu0 %v825
      %846 = vmatprep.subr.mxu0 0.0
      %847 = vmatpush1.msra.mxu0 %v826
      %848 = vmatprep.subr.mxu0 0.0
      %849 = vmatpush1.msra.mxu0 %v827
      %850 = vmatprep.subr.mxu0 0.0
      %851 = vmatpush1.msra.mxu0 %v828
      %852 = vmatprep.subr.mxu0 0.0
      %853 = vmatpush1.msra.mxu0 %v829
      %854 = vmatprep.subr.mxu0 0.0
      %855 = vmatpush1.msra.mxu0 %v830
      %856 = vmatprep.subr.mxu0 0.0
      %857 = vmatpush1.msra.mxu0 %v831
      %858 = vmatprep.subr.mxu0 0.0
      %859 = vmatpush1.msra.mxu0 %v832
      %860 = vmatprep.subr.mxu0 0.0
      %861 = vmatpush1.msra.mxu0 %v833
      %862 = vmatprep.subr.mxu0 0.0
      %863 = vmatpush1.msra.mxu0 %v834
      %864 = vmatprep.subr.mxu0 0.0
      %865 = vmatpush1.msra.mxu0 %v835
      %866 = vmatprep.subr.mxu0 0.0
      %867 = vmatpush1.msra.mxu0 %v836
      %868 = vmatprep.subr.mxu0 0.0
      %869 = vmatpush1.msra.mxu0 %v837
      %870 = vmatprep.subr.mxu0 0.0
      %871 = vmatpush1.msra.mxu0 0.0
      %872 = vmatprep.subr.mxu0 0.0
      %873 = vmatpush1.msra.mxu0 0.0
      %874 = vmatprep.subr.mxu0 0.0
      %875 = vmatpush1.msra.mxu0 0.0
      %876 = vmatprep.subr.mxu0 0.0
      %877 = vmatpush1.msra.mxu0 0.0
      %878 = vmatprep.subr.mxu0 0.0
      %879 = vmatpush1.msra.mxu0 0.0
      %880 = vmatprep.subr.mxu0 0.0
      %881 = vmatpush1.msra.mxu0 0.0
      %882 = vmatprep.subr.mxu0 0.0
      %883 = vmatpush1.msra.mxu0 0.0
      %884 = vmatprep.subr.mxu0 0.0
      %885 = vmatpush1.msra.mxu0 0.0
      %886 = vmatprep.subr.mxu0 0.0
      %887 = vmatpush1.msra.mxu0 0.0
      %888 = vmatprep.subr.mxu0 0.0
      %889 = vmatpush1.msra.mxu0 0.0
      %890 = vmatprep.subr.mxu0 0.0
      %891 = vmatpush1.msra.mxu0 0.0
      %892 = vmatprep.subr.mxu0 0.0
      %893 = vmatpush1.msra.mxu0 0.0
      %894 = vmatprep.subr.mxu0 0.0
      %895 = vmatpush1.msra.mxu0 0.0
      %896 = vmatprep.subr.mxu0 0.0
      %897 = vmatpush1.msra.mxu0 0.0
      %898 = vmatprep.subr.mxu0 0.0
      %899 = vmatpush1.msra.mxu0 0.0
      %900 = vmatprep.subr.mxu0 0.0
      %901 = vmatpush1.msra.mxu0 0.0
      %902 = vmatprep.mubr.f32.mxu0 0.0
      %903 = vmatmul.mubr.f32.gmra.mrb[0].mxu0 %v819
      %v904 = vpop.f32.mrb[0].mxu0
      %v905 = vadd.f32 0.0, %v904
      %v906 = vpop.f32.mrb[0].mxu0
      %907 = vmatprep.mubr.f32.mxu0 0.0
      %908 = vmatmul.mubr.f32.gmra.mrb[0].mxu0 %v821
      %v909 = vpop.f32.mrb[0].mxu0
      %v910 = vadd.f32 0.0, %v909
      %v911 = vpop.f32.mrb[0].mxu0
      %912 = vdwg.mxu0
      %913 = vst [vmem:[#allocation9] sm:$0xff] %v905
      %914 = vst [vmem:[#allocation9 + $0x8] sm:$0xff] %v910
    $region37: #{tpu_custom_call.1} parent=1 // pred_fallthru
      _
    // Predicated region
    $region38: #{tpu_custom_call.1} parent=1 // pred_check
      _
    $region39: #{tpu_custom_call.1} parent=1 // pred_check_branch
      %916 = sbr.rel (0) target = $region41
    $region40: #{tpu_custom_call.1} parent=1 // pred_region
      %s918 = ssub.s32 256, 256
      %919 = vsyncadd [#allocation5], %s918
      %s920 = sshll.u32 [#allocation9], 4
      %s921 = int_to_ptr.vmem [resolvable:$true] %s920
      %926 = dma.vmem_to_hbm [thread:$0]  %s921, 256, %s4, [#allocation5], 128, 128, 8
    $region41: #{tpu_custom_call.1} parent=1 // pred_fallthru
      _
    // Predicated region
    $region42: #{tpu_custom_call.1} parent=1 // pred_check
      _
    $region43: #{tpu_custom_call.1} parent=1 // pred_check_branch
      %928 = sbr.rel (0) target = $region45
    $region44: #{tpu_custom_call.1} parent=1 // pred_region
      %929 = dma.done [#allocation5], 256
    $region45: #{tpu_custom_call.1} parent=1 // pred_fallthru
      _
    %930 = vsyncpa [#allocation4], 1
    %931 = vsyncpa [#allocation7], 1
    %932 = vsyncpa [#allocation5], 1

</llo_original>
